<compile_context>
chip_gen: v5e
topology: v5e:2x2
jax: 0.10.0
libtpu: 0.0.40
codegen_flags: <defaults>
</compile_context>

<pallas_src>
import jax
import jax.numpy as jnp
from jax.experimental import pallas as pl
from jax.experimental.pallas import tpu as pltpu


def _pos_embed_kernel(x_ref, pe_ref, o_ref):
    # x_ref / o_ref: (ts, F) lane-dense tile; pe_ref: (ts, 1) f32 scale column.
    scale = pe_ref[...].astype(x_ref.dtype)          # tiny column, cast once
    o_ref[...] = x_ref[...] * scale                  # broadcast over lanes


def _pick_seq_tile(S, row_bytes, target_block_bytes=2 << 20, min_grid_steps=8):
    """Rows per block: ~target_block_bytes of lane-dense data, >= min_grid_steps
    grid steps when S allows it, and a multiple of 8 (sublane) unless it == S."""
    rows_cap = max(8, (target_block_bytes // max(row_bytes, 1)) // 8 * 8)
    rows_for_steps = max(8, (S // min_grid_steps) // 8 * 8)
    return min(rows_cap, rows_for_steps, S)


def my_positional_embedding(x, *, seq_tile=None):
    """x: (S, B, D). Returns x * exp(-arange(S))[:, None, None] (same shape/dtype)."""
    S, B, D = x.shape
    F = B * D
    x2 = x.reshape(S, F)                                        # lane-dense 2D view
    pe = jnp.exp(-jnp.arange(S, dtype=jnp.float32))[:, None]    # (S, 1) scale column

    if seq_tile is None:
        seq_tile = _pick_seq_tile(S, F * x.dtype.itemsize)
    else:
        seq_tile = min(seq_tile, S)
        if seq_tile < S:
            # sublane dim of a partial block must be a multiple of 8
            seq_tile = min(max(8, (seq_tile // 8) * 8), S)
    grid = (pl.cdiv(S, seq_tile),)

    out2 = pl.pallas_call(
        _pos_embed_kernel,
        out_shape=jax.ShapeDtypeStruct((S, F), x.dtype),
        grid_spec=pltpu.PrefetchScalarGridSpec(
            num_scalar_prefetch=0,
            grid=grid,
            in_specs=[
                pl.BlockSpec((seq_tile, F), lambda i: (i, 0)),
                pl.BlockSpec((seq_tile, 1), lambda i: (i, 0)),
            ],
            out_specs=pl.BlockSpec((seq_tile, F), lambda i: (i, 0)),
        ),
        compiler_params=pltpu.CompilerParams(
            dimension_semantics=("parallel",),
        ),
    )(x2, pe)
    return out2.reshape(S, B, D)


if __name__ == "__main__":
    # Small shapes consistent with the module: seq=8, batch=2, d_model=32.
    S, B, D = 8, 2, 32
    key = jax.random.PRNGKey(0)
    x = jax.random.normal(key, (S, B, D), dtype=jnp.float32)

    out = my_positional_embedding(x)
    out = jax.block_until_ready(out)

    # Pure-JAX reference of the PyTorch forward (pe = exp(-position)).
    pe_ref = jnp.exp(-jnp.arange(S, dtype=jnp.float32))[:, None, None]
    ref = x * pe_ref
    assert out.shape == x.shape and out.dtype == x.dtype
    assert jnp.allclose(out, ref, atol=1e-6, rtol=1e-6)

    print("KERNEL_OK")
</pallas_src>

<mosaic_0001>
module attributes {stable_mosaic.version = 11 : i64} {
  func.func @_pos_embed_kernel(%arg0: i32, %arg1: memref<8x64xf32, #tpu.memory_space<vmem>>, %arg2: memref<8x1xf32, #tpu.memory_space<vmem>>, %arg3: memref<8x64xf32, #tpu.memory_space<vmem>>) attributes {dimension_semantics = [#tpu.dimension_semantics<parallel>], iteration_bounds = array<i64: 1>, scalar_prefetch = 0 : i64, scratch_operands = 0 : i64, tpu.core_type = #tpu.core_type<tc>, window_params = [{transform_indices = @transform_0, window_bounds = array<i64: 8, 64>}, {transform_indices = @transform_1, window_bounds = array<i64: 8, 1>}, {transform_indices = @transform_2, window_bounds = array<i64: 8, 64>}]} {
    %c0 = arith.constant 0 : index
    %c0_0 = arith.constant 0 : index
    %0 = vector.load %arg2[%c0, %c0_0] : memref<8x1xf32, #tpu.memory_space<vmem>>, vector<8x1xf32>
    %c0_1 = arith.constant 0 : index
    %c0_2 = arith.constant 0 : index
    %1 = vector.load %arg1[%c0_1, %c0_2] : memref<8x64xf32, #tpu.memory_space<vmem>>, vector<8x64xf32>
    %2 = vector.broadcast %0 : vector<8x1xf32> to vector<8x64xf32>
    %3 = arith.mulf %1, %2 : vector<8x64xf32>
    %c0_3 = arith.constant 0 : index
    %c0_4 = arith.constant 0 : index
    %4 = vector.load %arg3[%c0_3, %c0_4] : memref<8x64xf32, #tpu.memory_space<vmem>>, vector<8x64xf32>
    tpu.vector_store %arg3[%c0_3, %c0_4], %3 {strides = array<i32>} : memref<8x64xf32, #tpu.memory_space<vmem>>, vector<8x64xf32>,
    return
  }
  func.func @transform_0(%arg0: i32) -> (i32, i32) {
    %c0_i32 = arith.constant 0 : i32
    %c0_i32_0 = arith.constant 0 : i32
    return %arg0, %c0_i32 : i32, i32
  }
  func.func @transform_1(%arg0: i32) -> (i32, i32) {
    %c0_i32 = arith.constant 0 : i32
    %c0_i32_0 = arith.constant 0 : i32
    return %arg0, %c0_i32 : i32, i32
  }
  func.func @transform_2(%arg0: i32) -> (i32, i32) {
    %c0_i32 = arith.constant 0 : i32
    %c0_i32_0 = arith.constant 0 : i32
    return %arg0, %c0_i32 : i32, i32
  }
}

</mosaic_0001>

<llo_original>
// kernel: tpu_custom_call.1
$region0: #{tpu_custom_call.1}
  #allocation0 [shape = 'u32[]', space=smem, size = 0x4, offset = 0x4, fixed_abs, tag = 'smem constant byte address 0x4 - core index']
  #allocation1 [shape = 'u32[72,128]{1,0:T(1,128)}', space=vmem, size = 0x9000, scoped, tag = 'internal scratch']
  %s0 = inlined_call_operand.vmem [shape: f32[8,64], index: 0, kind: input, shape index: {}]
  %s1 = inlined_call_operand.vmem [shape: f32[8,1], index: 1, kind: input, shape index: {}]
  %s2 = inlined_call_operand.hbm [shape: f32[8,64], index: 2, kind: output, shape index: {}]
  %s3 = sld [smem:[#allocation0]]
  $region18: #{tpu_custom_call.1} parent=0
    _
  %s5 = ssub.s32 1, %s3
  %s6 = scalar_select 0, %s5, %s3
  $region1: #{tpu_custom_call.1} parent=0
    #allocation2 [shape = 'u8[4096]{0}', space=vmem, size = 0x1000, scoped, tag = 'output window, operand 0, single buffered']
    #allocation3 [shape = 's32[1]{0}', space=sflag, size = 0x4, scoped, tag = 'scoped memory for tpu_custom_call.1']
    %7 = vsyncpa [#allocation3], 0
    // Predicated region
    $region2: #{tpu_custom_call.1} parent=1 // pred_check
      _
    $region3: #{tpu_custom_call.1} parent=1 // pred_check_branch
      %9 = sbr.rel (0) target = $region5
    $region4: #{tpu_custom_call.1} parent=1 // pred_region
      _
    $region5: #{tpu_custom_call.1} parent=1 // pred_fallthru
      _
    // Predicated region
    $region6: #{tpu_custom_call.1} parent=1 // pred_check
      _
    $region7: #{tpu_custom_call.1} parent=1 // pred_check_branch
      %11 = sbr.rel (0) target = $region9
    $region8: #{tpu_custom_call.1} parent=1 // pred_region
      _
    $region9: #{tpu_custom_call.1} parent=1 // pred_fallthru
      _
    %v12 = vld [vmem:[%s1] sm:$0xff]
    %v13 = vld [vmem:[%s0] sm:$0xff]
    %15 = vset.pattern.permute.xlu0 0
    %16 = vperm.xlu0 %15, %v12
    %v17 = vpop.permute.xlu0 %16
    %v19 = vmul.f32 %v13, %v17
    %vm20 = vcmask 523264
    %21 = vst.msk [vmem:[#allocation2] sm:$0xff] %vm20, %v19
    // Predicated region
    $region10: #{tpu_custom_call.1} parent=1 // pred_check
      _
    $region11: #{tpu_custom_call.1} parent=1 // pred_check_branch
      %23 = sbr.rel (0) target = $region13
    $region12: #{tpu_custom_call.1} parent=1 // pred_region
      %25 = vsyncadd [#allocation3], 0
      %s27 = sshll.u32 [#allocation2], 4
      %s28 = int_to_ptr.vmem [resolvable:$true] %s27
      %s29 = sshll.u32 %s2, 4
      %s30 = int_to_ptr.hbm [resolvable:$true] %s29
      %32 = dma.vmem_to_hbm [thread:$0]  %s28, 128, %s30, [#allocation3]
    $region13: #{tpu_custom_call.1} parent=1 // pred_fallthru
      _
    // Predicated region
    $region14: #{tpu_custom_call.1} parent=1 // pred_check
      _
    $region15: #{tpu_custom_call.1} parent=1 // pred_check_branch
      %34 = sbr.rel (0) target = $region17
    $region16: #{tpu_custom_call.1} parent=1 // pred_region
      %36 = dma.done [#allocation3], 128
    $region17: #{tpu_custom_call.1} parent=1 // pred_fallthru
      _
    %37 = vsyncpa [#allocation3], 1

</llo_original>
